<compile_context>
chip_gen: v6e
topology: v6e:2x2x1
jax: 0.10.0
libtpu: 0.0.40
codegen_flags: <defaults>
</compile_context>

<pallas_src>
import functools

import jax
import jax.numpy as jnp
from jax import lax
from jax.experimental import pallas as pl
from jax.experimental.pallas import tpu as pltpu

LANES = 128
TARGET_BLOCK_BYTES = 4 * 1024 * 1024   # per input per grid step
MIN_BLOCK_BYTES = 1 * 1024 * 1024      # floor when shrinking for the megacore split
CHUNK_ROWS = 1024                      # rows per inner accumulation chunk


def _round_up(x, m):
    return ((x + m - 1) // m) * m


def _cosh_sum_kernel(a_ref, b_ref, out_ref, *, block_rows, chunk_rows,
                     tiles_per_slice, rows_valid):
    """Accumulate sum(cosh(a - b)) into a resident (8,128) f32 output tile.

    Grid = (num_slices, tiles_per_slice); axis 0 is "parallel" (megacore),
    axis 1 is "arbitrary" (output tile stays resident, accumulator pattern).
    Rows >= rows_valid (partial last tile / phantom megacore tile) are masked
    out with a select so unspecified OOB data never propagates.
    """
    p = pl.program_id(0)
    i = pl.program_id(1)

    @pl.when(i == 0)
    def _():
        out_ref[...] = jnp.zeros_like(out_ref)

    # Logical (unclamped) start row of this tile in the global row stream.
    block_start = (p * tiles_per_slice + i) * block_rows

    num_chunks = block_rows // chunk_rows
    row_iota = lax.broadcasted_iota(jnp.int32, (chunk_rows, LANES), 0)

    def body(j, carry):
        r0 = pl.multiple_of(j * chunk_rows, chunk_rows)
        da = a_ref[pl.ds(r0, chunk_rows), :].astype(jnp.float32)
        db = b_ref[pl.ds(r0, chunk_rows), :].astype(jnp.float32)
        d = da - db
        # cosh(x) = 0.5 * (exp(-|x|) + 1/exp(-|x|)) -> one exp + one reciprocal (EUP)
        t = jnp.exp(-jnp.abs(d))
        c = 0.5 * (pl.reciprocal(t) + t)
        # Mask rows past the valid count (select, not multiply, so garbage
        # inf/NaN in dead rows contributes exactly 0).
        limit = rows_valid - block_start - r0
        c = jnp.where(row_iota < limit, c, 0.0)
        # Fold (chunk_rows, 128) -> (8, 128) with pure vector adds.
        return carry + c.reshape(chunk_rows // 8, 8, LANES).sum(axis=0)

    acc = lax.fori_loop(0, num_chunks, body,
                        jnp.zeros((8, LANES), jnp.float32), unroll=True)
    out_ref[...] += acc


def _cosh_sum_pallas(a2, b2, rows, block_rows, chunk_rows,
                     num_slices, tiles_per_slice):
    num_tiles = pl.cdiv(rows, block_rows)
    last_block = num_tiles - 1

    # Clamp phantom grid steps (odd tile counts with a 2-way split) onto the
    # last real block; the kernel's row mask zeroes their contribution.
    def in_map(p, i):
        return (jnp.minimum(p * tiles_per_slice + i, last_block), 0)

    kernel = functools.partial(
        _cosh_sum_kernel,
        block_rows=block_rows,
        chunk_rows=chunk_rows,
        tiles_per_slice=tiles_per_slice,
        rows_valid=rows,
    )

    n_main = rows * LANES
    cost = pl.CostEstimate(
        flops=8 * n_main,
        transcendentals=2 * n_main,
        bytes_accessed=n_main * (a2.dtype.itemsize + b2.dtype.itemsize)
        + num_slices * 8 * LANES * 4,
    )

    out = pl.pallas_call(
        kernel,
        out_shape=jax.ShapeDtypeStruct((num_slices * 8, LANES), jnp.float32),
        grid_spec=pltpu.PrefetchScalarGridSpec(
            num_scalar_prefetch=0,
            grid=(num_slices, tiles_per_slice),
            in_specs=[
                pl.BlockSpec((block_rows, LANES), in_map),
                pl.BlockSpec((block_rows, LANES), in_map),
            ],
            out_specs=pl.BlockSpec((8, LANES), lambda p, i: (p, 0)),
        ),
        compiler_params=pltpu.CompilerParams(
            dimension_semantics=("parallel", "arbitrary"),
            vmem_limit_bytes=32 * 1024 * 1024,
        ),
        cost_estimate=cost,
    )(a2, b2)
    # Lane-dense (num_slices*8, 128) partials -> scalar here (tiny).
    return jnp.sum(out)


@jax.jit
def logcosh_loss(y_t, y_prime_t):
    """Pallas implementation of LogCoshLoss.forward: mean(cosh(y_t - y_prime_t))."""
    assert y_t.shape == y_prime_t.shape
    a = y_t.reshape(-1)
    b = y_prime_t.reshape(-1)
    if b.dtype != a.dtype:
        b = b.astype(a.dtype)

    n = a.size
    rows = n // LANES
    total = jnp.float32(0.0)

    if rows > 0:
        n_main = rows * LANES
        a2 = a[:n_main].reshape(rows, LANES)
        b2 = b[:n_main].reshape(rows, LANES)

        itemsize = a2.dtype.itemsize
        sub = 8 * max(1, 4 // itemsize)  # sublane packing: 8 f32 / 16 bf16 / 32 8-bit
        max_block_rows = max(sub, TARGET_BLOCK_BYTES // (LANES * itemsize))
        min_block_rows = max(sub, MIN_BLOCK_BYTES // (LANES * itemsize))

        block_rows = min(max_block_rows, _round_up(rows, sub))
        num_tiles = pl.cdiv(rows, block_rows)

        # Megacore (v7x): aim for >= 2 grid steps per TensorCore; shrink the
        # block (not below ~1 MiB/input) rather than giving a core one block.
        if num_tiles < 4 and rows >= 4 * min_block_rows:
            block_rows = max(min_block_rows, _round_up(pl.cdiv(rows, 4), sub))
            num_tiles = pl.cdiv(rows, block_rows)

        # Inner accumulation chunk must evenly divide the block.
        if block_rows > CHUNK_ROWS:
            block_rows = _round_up(block_rows, CHUNK_ROWS)
            num_tiles = pl.cdiv(rows, block_rows)
            chunk_rows = CHUNK_ROWS
        else:
            chunk_rows = block_rows

        num_slices = 2 if num_tiles >= 4 else 1
        tiles_per_slice = pl.cdiv(num_tiles, num_slices)

        total = total + _cosh_sum_pallas(a2, b2, rows, block_rows, chunk_rows,
                                         num_slices, tiles_per_slice)

    # Sub-128-element tail: handled on a tiny slice in plain JAX (no pad copy).
    rem = n - rows * LANES
    if rem:
        ta = a[rows * LANES:].astype(jnp.float32)
        tb = b[rows * LANES:].astype(jnp.float32)
        total = total + jnp.sum(jnp.cosh(ta - tb))

    return total / jnp.float32(n)


if __name__ == "__main__":
    key = jax.random.PRNGKey(0)
    k1, k2, k3, k4 = jax.random.split(key, 4)

    # GAN output-like tensor (N, C, H, W) — lane-aligned case.
    x_shape = (2, 4, 16, 16)
    y_t = jax.random.normal(k1, x_shape, dtype=jnp.float32)
    y_prime_t = jax.random.normal(k2, x_shape, dtype=jnp.float32)

    loss = logcosh_loss(y_t, y_prime_t)
    jax.block_until_ready(loss)
    ref = jnp.mean(jnp.cosh(y_t - y_prime_t))
    assert jnp.allclose(loss, ref, rtol=1e-5, atol=1e-5), (loss, ref)

    # Ragged case: exercises the partial-tile mask and the <128-element tail.
    r_shape = (3, 5, 7, 11)
    a = jax.random.normal(k3, r_shape, dtype=jnp.float32)
    b = jax.random.normal(k4, r_shape, dtype=jnp.float32)
    loss2 = logcosh_loss(a, b)
    jax.block_until_ready(loss2)
    ref2 = jnp.mean(jnp.cosh(a - b))
    assert jnp.allclose(loss2, ref2, rtol=1e-5, atol=1e-5), (loss2, ref2)

    print("KERNEL_OK")
</pallas_src>

<mosaic_0001>
module attributes {stable_mosaic.version = 11 : i64} {
  func.func @_cosh_sum_kernel(%arg0: i32, %arg1: i32, %arg2: memref<16x128xf32, #tpu.memory_space<vmem>>, %arg3: memref<16x128xf32, #tpu.memory_space<vmem>>, %arg4: memref<8x128xf32, #tpu.memory_space<vmem>>) attributes {dimension_semantics = [#tpu.dimension_semantics<parallel>, #tpu.dimension_semantics<arbitrary>], iteration_bounds = array<i64: 1, 1>, scalar_prefetch = 0 : i64, scratch_operands = 0 : i64, tpu.core_type = #tpu.core_type<tc>, window_params = [{transform_indices = @transform_0, window_bounds = array<i64: 16, 128>}, {transform_indices = @transform_1, window_bounds = array<i64: 16, 128>}, {transform_indices = @transform_2, window_bounds = array<i64: 8, 128>}]} {
    %c0_i32 = arith.constant 0 : i32
    %0 = arith.cmpi eq, %arg1, %c0_i32 : i32
    %1 = arith.extui %0 : i1 to i32
    %c0_i32_0 = arith.constant 0 : i32
    %2 = arith.cmpi ne, %1, %c0_i32_0 : i32
    scf.if %2 {
      %cst_14 = arith.constant 0.000000e+00 : f32
      %35 = vector.broadcast %cst_14 : f32 to vector<8x128xf32>
      %c0_15 = arith.constant 0 : index
      %c0_16 = arith.constant 0 : index
      %36 = vector.load %arg4[%c0_15, %c0_16] : memref<8x128xf32, #tpu.memory_space<vmem>>, vector<8x128xf32>
      tpu.vector_store %arg4[%c0_15, %c0_16], %35 {strides = array<i32>} : memref<8x128xf32, #tpu.memory_space<vmem>>, vector<8x128xf32>,
    } else {
    }
    %c1_i32 = arith.constant 1 : i32
    %3 = arith.muli %arg0, %c1_i32 : i32
    %4 = arith.addi %3, %arg1 : i32
    %c16_i32 = arith.constant 16 : i32
    %5 = arith.muli %4, %c16_i32 : i32
    %6 = tpu.iota {dimensions = array<i32: 0>} : vector<16x128xi32>
    %cst = arith.constant 0.000000e+00 : f32
    %7 = vector.broadcast %cst : f32 to vector<8x128xf32>
    %c0_i32_1 = arith.constant 0 : i32
    %c16_i32_2 = arith.constant 16 : i32
    %8 = arith.muli %c0_i32_1, %c16_i32_2 : i32
    %9 = tpu.assume_multiple %8, 16 : i32
    %10 = arith.index_cast %9 : i32 to index
    %c0 = arith.constant 0 : index
    %11 = vector.load %arg2[%10, %c0] : memref<16x128xf32, #tpu.memory_space<vmem>>, vector<16x128xf32>
    %12 = arith.index_cast %9 : i32 to index
    %c0_3 = arith.constant 0 : index
    %13 = vector.load %arg3[%12, %c0_3] : memref<16x128xf32, #tpu.memory_space<vmem>>, vector<16x128xf32>
    %14 = arith.subf %11, %13 : vector<16x128xf32>
    %15 = math.absf %14 : vector<16x128xf32>
    %cst_4 = arith.constant 0.000000e+00 : f32
    %16 = vector.broadcast %cst_4 : f32 to vector<16x128xf32>
    %17 = arith.subf %16, %15 : vector<16x128xf32>
    %18 = math.exp %17 : vector<16x128xf32>
    %19 = tpu.reciprocal %18 : vector<16x128xf32> -> vector<16x128xf32>
    %20 = arith.addf %19, %18 : vector<16x128xf32>
    %cst_5 = arith.constant 5.000000e-01 : f32
    %21 = vector.broadcast %cst_5 : f32 to vector<16x128xf32>
    %22 = arith.mulf %21, %20 : vector<16x128xf32>
    %c16_i32_6 = arith.constant 16 : i32
    %23 = arith.subi %c16_i32_6, %5 : i32
    %24 = arith.subi %23, %9 : i32
    %25 = vector.broadcast %24 : i32 to vector<16x128xi32>
    %26 = arith.cmpi slt, %6, %25 : vector<16x128xi32>
    %cst_7 = arith.constant 0.000000e+00 : f32
    %27 = vector.broadcast %cst_7 : f32 to vector<16x128xf32>
    %28 = arith.select %26, %22, %27 : vector<16x128xi1>, vector<16x128xf32>
    %29 = vector.shape_cast %28 : vector<16x128xf32> to vector<2x8x128xf32>
    %cst_8 = arith.constant dense<0.000000e+00> : vector<8x128xf32>
    %30 = vector.multi_reduction <add>, %29, %cst_8 [0] : vector<2x8x128xf32> to vector<8x128xf32>
    %31 = arith.addf %7, %30 : vector<8x128xf32>
    %c1_i32_9 = arith.constant 1 : i32
    %c0_10 = arith.constant 0 : index
    %c0_11 = arith.constant 0 : index
    %32 = vector.load %arg4[%c0_10, %c0_11] : memref<8x128xf32, #tpu.memory_space<vmem>>, vector<8x128xf32>
    %33 = arith.addf %32, %31 : vector<8x128xf32>
    %c0_12 = arith.constant 0 : index
    %c0_13 = arith.constant 0 : index
    %34 = vector.load %arg4[%c0_12, %c0_13] : memref<8x128xf32, #tpu.memory_space<vmem>>, vector<8x128xf32>
    tpu.vector_store %arg4[%c0_12, %c0_13], %33 {strides = array<i32>} : memref<8x128xf32, #tpu.memory_space<vmem>>, vector<8x128xf32>,
    return
  }
  func.func @transform_0(%arg0: i32, %arg1: i32) -> (i32, i32) {
    %c1_i32 = arith.constant 1 : i32
    %0 = arith.muli %arg0, %c1_i32 : i32
    %1 = arith.addi %0, %arg1 : i32
    %c0_i32 = arith.constant 0 : i32
    %2 = arith.minsi %1, %c0_i32 : i32
    %c0_i32_0 = arith.constant 0 : i32
    %c0_i32_1 = arith.constant 0 : i32
    return %2, %c0_i32_0 : i32, i32
  }
  func.func @transform_1(%arg0: i32, %arg1: i32) -> (i32, i32) {
    %c1_i32 = arith.constant 1 : i32
    %0 = arith.muli %arg0, %c1_i32 : i32
    %1 = arith.addi %0, %arg1 : i32
    %c0_i32 = arith.constant 0 : i32
    %2 = arith.minsi %1, %c0_i32 : i32
    %c0_i32_0 = arith.constant 0 : i32
    %c0_i32_1 = arith.constant 0 : i32
    return %2, %c0_i32_0 : i32, i32
  }
  func.func @transform_2(%arg0: i32, %arg1: i32) -> (i32, i32) {
    %c0_i32 = arith.constant 0 : i32
    %c0_i32_0 = arith.constant 0 : i32
    return %arg0, %c0_i32 : i32, i32
  }
}

</mosaic_0001>

<llo_original>
// kernel: logcosh_loss.1
$region0: #{logcosh_loss.1}
  #allocation0 [shape = 'u32[]', space=smem, size = 0x4, offset = 0x4, fixed_abs, tag = 'smem constant byte address 0x4 - core index']
  #allocation1 [shape = 'u32[144,128]{1,0:T(1,128)}', space=vmem, size = 0x12000, scoped, tag = 'internal scratch']
  %s0 = inlined_call_operand.vmem [shape: f32[16,128], index: 0, kind: input, shape index: {}]
  %s1 = inlined_call_operand.vmem [shape: f32[16,128], index: 1, kind: input, shape index: {}]
  %s2 = inlined_call_operand.vmem [shape: f32[8,128], index: 2, kind: output, shape index: {}]
  %s3 = sld [smem:[#allocation0]]
  $region22: #{logcosh_loss.1} parent=0
    _
  %s5 = ssub.s32 1, %s3
  %s6 = scalar_select 0, %s5, %s3
  // Predicated region
  $region2: #{logcosh_loss.1} parent=0 // pred_check
    _
  $region3: #{logcosh_loss.1} parent=0 // pred_check_branch
    %8 = sbr.rel (0) target = $region5
  $region4: #{logcosh_loss.1} parent=0 // pred_region
    %s9 = sadd.s32 0, 0
    %p10 = scmp.lt.s32.totalorder %s9, 0
    %s11 = scalar_select %p10, %s9, 0
    %s12 = smul.u32 2, %s11
    %p13 = scmp.lt.s32.totalorder %s12, 1
    %s14 = scalar_select %p13, %s12, 1
    %s15 = smul.addr %s14, 8
    %s16 = scalar_lea.vmem %s0, %s15
    %s17 = sadd.s32 0, 0
    %p18 = scmp.lt.s32.totalorder %s17, 0
    %s19 = scalar_select %p18, %s17, 0
    %s20 = smul.u32 2, %s19
  $region5: #{logcosh_loss.1} parent=0 // pred_fallthru
    _
  // Predicated region
  $region6: #{logcosh_loss.1} parent=0 // pred_check
    _
  $region7: #{logcosh_loss.1} parent=0 // pred_check_branch
    %22 = sbr.rel (0) target = $region9
  $region8: #{logcosh_loss.1} parent=0 // pred_region
    %s23 = sadd.s32 0, 0
    %p24 = scmp.lt.s32.totalorder %s23, 0
    %s25 = scalar_select %p24, %s23, 0
    %s26 = smul.u32 2, %s25
    %p27 = scmp.lt.s32.totalorder %s26, 1
    %s28 = scalar_select %p27, %s26, 1
    %s29 = smul.addr %s28, 8
    %s30 = scalar_lea.vmem %s1, %s29
    %s31 = sadd.s32 0, 0
    %p32 = scmp.lt.s32.totalorder %s31, 0
    %s33 = scalar_select %p32, %s31, 0
    %s34 = smul.u32 2, %s33
  $region9: #{logcosh_loss.1} parent=0 // pred_fallthru
    _
  %s35 = sadd.s32 0, 0
  %p36 = scmp.lt.s32.totalorder %s35, 0
  %s37 = scalar_select %p36, %s35, 0
  %s38 = smul.u32 2, %s37
  %p39 = scmp.lt.s32.totalorder %s38, 1
  %s40 = scalar_select %p39, %s38, 1
  %s41 = smul.addr %s40, 8
  %s42 = scalar_lea.vmem %s0, %s41
  %s43 = sadd.s32 0, 0
  %p44 = scmp.lt.s32.totalorder %s43, 0
  %s45 = scalar_select %p44, %s43, 0
  %s46 = smul.u32 2, %s45
  %p47 = scmp.lt.s32.totalorder %s46, 1
  %s48 = scalar_select %p47, %s46, 1
  %s49 = smul.addr %s48, 8
  %s50 = scalar_lea.vmem %s1, %s49
  %s51 = sadd.s32 0, 0
  %p52 = scmp.lt.s32.totalorder %s51, 0
  %s53 = scalar_select %p52, %s51, 0
  %s54 = smul.u32 2, %s53
  %p55 = scmp.lt.s32.totalorder %s54, 1
  %s56 = scalar_select %p55, %s54, 1
  %s57 = smul.addr %s56, 8
  %s58 = scalar_lea.vmem %s0, %s57
  %s59 = sadd.s32 0, 0
  %p60 = scmp.lt.s32.totalorder %s59, 0
  %s61 = scalar_select %p60, %s59, 0
  %s62 = smul.u32 2, %s61
  %s63 = sadd.s32 0, 0
  %p64 = scmp.lt.s32.totalorder %s63, 0
  %s65 = scalar_select %p64, %s63, 0
  %s66 = smul.u32 2, %s65
  %p67 = scmp.lt.s32.totalorder %s66, 1
  %s68 = scalar_select %p67, %s66, 1
  %s69 = smul.addr %s68, 8
  %s70 = scalar_lea.vmem %s1, %s69
  %s71 = sadd.s32 0, 0
  %p72 = scmp.lt.s32.totalorder %s71, 0
  %s73 = scalar_select %p72, %s71, 0
  %s74 = smul.u32 2, %s73
  %p75 = scmp.eq.s32.totalorder 0, 0
  // Predicated region
  $region10: #{logcosh_loss.1} parent=0 // pred_check
    %p76 = pneg %p75
  $region11: #{logcosh_loss.1} parent=0 // pred_check_branch
    %78 = sbr.rel (%p76) target = $region13
  $region12: #{logcosh_loss.1} parent=0 // pred_region
    %79 = vst [vmem:[%s2] sm:$0xff] 0.0
  $region13: #{logcosh_loss.1} parent=0 // pred_fallthru
    _
  %s80 = sadd.s32 0, 0
  %s81 = smul.u32 %s80, 16
  %v82 = vlaneseq
  %v83 = vshrl.u32 %v82, 7
  %v84 = vadd.s32 %v83, 8
  %v85 = vld [vmem:[%s58] sm:$0xff]
  %v86 = vld [vmem:[%s58 + $0x8] sm:$0xff]
  %v87 = vld [vmem:[%s70] sm:$0xff]
  %v88 = vld [vmem:[%s70 + $0x8] sm:$0xff]
  %v89 = vsub.f32 %v85, %v87
  %v90 = vsub.f32 %v86, %v88
  %v91 = vand.u32 2147483647, %v89
  %v92 = vand.u32 2147483647, %v90
  %v93 = vsub.f32 0.0, %v91
  %v94 = vsub.f32 0.0, %v92
  %v95 = vmul.f32 %v93, 1.442695
  %v96 = vpow.pop %v95
  %v97 = vmul.f32 %v94, 1.442695
  %v98 = vpow.pop %v97
  %v99 = vrcp.pop %v96
  %v100 = vrcp.pop %v98
  %v101 = vadd.f32 %v99, %v96
  %v102 = vadd.f32 %v100, %v98
  %v103 = vmul.f32 %v101, 0.5
  %v104 = vmul.f32 %v102, 0.5
  %s105 = ssub.s32 16, %s81
  %s106 = ssub.s32 %s105, 0
  %v107 = vstv %s106
  %vm108 = vcmp.lt.s32.totalorder %v83, %v107
  %vm109 = vcmp.lt.s32.totalorder %v84, %v107
  %v110 = vsel %vm108, %v103, 0.0
  %v111 = vsel %vm109, %v104, 0.0
  %v112 = vadd.f32 %v110, %v111
  %v113 = vadd.f32 %v112, 0.0
  %v114 = vld [vmem:[%s2] sm:$0xff]
  %v115 = vadd.f32 %v114, %v113
  %116 = vst [vmem:[%s2] sm:$0xff] %v115
  // Predicated region
  $region14: #{logcosh_loss.1} parent=0 // pred_check
    _
  $region15: #{logcosh_loss.1} parent=0 // pred_check_branch
    %118 = sbr.rel (0) target = $region17
  $region16: #{logcosh_loss.1} parent=0 // pred_region
    _
  $region17: #{logcosh_loss.1} parent=0 // pred_fallthru
    _
  // Predicated region
  $region18: #{logcosh_loss.1} parent=0 // pred_check
    _
  $region19: #{logcosh_loss.1} parent=0 // pred_check_branch
    %120 = sbr.rel (0) target = $region21
  $region20: #{logcosh_loss.1} parent=0 // pred_region
    _
  $region21: #{logcosh_loss.1} parent=0 // pred_fallthru
    _

</llo_original>
